<compile_context>
chip_gen: v7x
topology: tpu7x:2x2x1
jax: 0.10.0
libtpu: 0.0.40
codegen_flags: <defaults>
</compile_context>

<pallas_src>
import functools
import math

import jax
import jax.numpy as jnp
from jax.experimental import pallas as pl
from jax.experimental.pallas import tpu as pltpu


def _round_up(x, m):
    return ((x + m - 1) // m) * m


def _make_kernel(has_bias):
    def kernel(*refs):
        if has_bias:
            (dec_ref, enc_ref, bias_ref, wa_ref, ua_ref, va_ref,
             ctx_ref, attn_ref) = refs
        else:
            (dec_ref, enc_ref, wa_ref, ua_ref, va_ref,
             ctx_ref, attn_ref) = refs
            bias_ref = None

        BB, S, De = enc_ref.shape
        Dd = ua_ref.shape[0]

        enc = enc_ref[...]                                         # (BB,S,De) compute dtype

        # Key projection: fold batch into MXU rows -> one (BB*S,De)x(De,Dd)
        # matmul, f32 accumulation. S is padded to a multiple of 8 by the
        # wrapper so this reshape stays tile-aligned (no VMEM copy).
        proj_enc = jnp.dot(enc.reshape(BB * S, De), wa_ref[...],
                           preferred_element_type=jnp.float32)     # (BB*S, Dd)
        proj_enc = proj_enc.reshape(BB, S, Dd)

        # Query projection: one matmul per batch block.
        proj_dec = jnp.dot(dec_ref[...], ua_ref[...],
                           preferred_element_type=jnp.float32)     # (BB, Dd)

        t = jnp.tanh(proj_enc + proj_dec[:, None, :])              # (BB,S,Dd) f32

        # Additive score: VPU multiply + lane reduce (avoids an N=1 MXU matmul).
        score = jnp.sum(t * va_ref[...][None, :, :], axis=-1)      # (BB,S) f32

        if bias_ref is not None:
            score = score + bias_ref[...]                          # 0 / -1e9 additive bias

        # Softmax over the sequence (lane) axis; reciprocal on the EUP slot.
        m = jnp.max(score, axis=-1, keepdims=True)                 # (BB,1)
        e = jnp.exp(score - m)                                     # (BB,S)
        inv = pl.reciprocal(jnp.sum(e, axis=-1, keepdims=True),
                            approx=True)                           # (BB,1)

        # Context from UNNORMALIZED weights: VPU multiply + sublane reduce
        # (no M=1 batched matmul), normalized once afterwards.
        ctx = jnp.sum(e[:, :, None] * enc.astype(jnp.float32), axis=1)   # (BB,De)
        ctx = ctx * inv

        # Lane/sublane-dense 2-D stores (no size-1 sublane dim).
        ctx_ref[...] = ctx.astype(ctx_ref.dtype)
        attn_ref[...] = (e * inv).astype(attn_ref.dtype)

    return kernel


def _pick_batch_block(B, S_pad, De, Dd, enc_bytes):
    """Pick BB (multiple of 8) from a VMEM/DMA budget:
      * per-step working set (double-buffered pipeline blocks + f32
        intermediates) stays under a conservative ~24 MiB (v7x-safe);
      * encoder block DMA targets >= ~1 MiB per step;
      * keep >= 2 grid steps when B > 8 so dimension_semantics=('parallel',)
        can shard across TensorCores (v7x megacore)."""
    VMEM_BUDGET = 24 << 20

    per_row = (2 * S_pad * De * enc_bytes          # enc block, double-buffered
               + 2 * S_pad * Dd * 4                # proj_enc / tanh f32 intermediates
               + 6 * S_pad * 4                     # score / e / attn f32
               + 2 * (De + S_pad + Dd) * 4)        # ctx/attn/dec blocks, double-buffered
    bb_budget = max(8, (VMEM_BUDGET // max(per_row, 1)) // 8 * 8)

    # DMA efficiency: aim for >= ~1 MiB per encoder block.
    bb_dma = _round_up(
        max(1, math.ceil((1 << 20) / max(S_pad * De * enc_bytes, 1))), 8)

    bb = min(bb_budget, bb_dma)
    if B > 8:
        bb = min(bb, _round_up(math.ceil(B / 2), 8))   # >= 2 grid steps
    bb = min(bb, _round_up(B, 8))
    return max(8, bb)


def bahdanau_attention(decoder_hidden, encoder_outputs, wa, ua, va,
                       encoder_mask=None, compute_dtype=jnp.bfloat16):
    """Bahdanau additive attention.

    Args:
      decoder_hidden : (B, Dd) f32, query.
      encoder_outputs: (B, S, De) f32, keys/values.
      wa: (Dd, De), ua: (Dd, Dd), va: (1, Dd)  (torch nn.Linear (out, in) layout).
      encoder_mask: optional (B, S), nonzero = valid token.
      compute_dtype: MXU/HBM dtype for encoder/weights (default bf16).

    Returns:
      context_vector (B, 1, De), attention_weights (B, 1, S)  [matches the
      PyTorch module's actual return shapes].
    """
    B, S, De = encoder_outputs.shape
    Dd = decoder_hidden.shape[1]
    out_dtype = encoder_outputs.dtype

    S_pad = _round_up(S, 8)
    enc_bytes = jnp.dtype(compute_dtype).itemsize
    BB = _pick_batch_block(B, S_pad, De, Dd, enc_bytes)
    B_pad = _round_up(B, BB)
    grid = (B_pad // BB,)

    # Cast the bandwidth-dominant operands to the compute dtype and pad.
    # (De/Dd are left un-padded: inflating them to 128 would add HBM bytes to
    #  an HBM-bound kernel; the full-extent BlockSpecs are still legal.)
    enc = jnp.pad(encoder_outputs.astype(compute_dtype),
                  ((0, B_pad - B), (0, S_pad - S), (0, 0)))
    dec = jnp.pad(decoder_hidden.astype(compute_dtype),
                  ((0, B_pad - B), (0, 0)))
    wa_t = wa.T.astype(compute_dtype)          # (De, Dd)
    ua_t = ua.T.astype(compute_dtype)          # (Dd, Dd)
    va_row = va.astype(jnp.float32)            # (1, Dd), VPU multiply stays f32

    # Mask -> f32 additive bias (0 / -1e9); also needed whenever S was padded.
    has_bias = (encoder_mask is not None) or (S_pad != S)

    args = [dec, enc]
    in_specs = [
        pl.BlockSpec((BB, Dd), lambda b: (b, 0)),          # decoder hidden
        pl.BlockSpec((BB, S_pad, De), lambda b: (b, 0, 0)),  # encoder outputs
    ]
    if has_bias:
        if encoder_mask is not None:
            valid = encoder_mask.astype(bool)
        else:
            valid = jnp.ones((B, S), dtype=bool)
        valid = jnp.pad(valid, ((0, B_pad - B), (0, S_pad - S)),
                        constant_values=False)
        bias = jnp.where(valid, jnp.float32(0.0), jnp.float32(-1e9))
        args.append(bias)
        in_specs.append(pl.BlockSpec((BB, S_pad), lambda b: (b, 0)))
    args += [wa_t, ua_t, va_row]
    in_specs += [
        pl.BlockSpec((De, Dd), lambda b: (0, 0)),          # Wa^T
        pl.BlockSpec((Dd, Dd), lambda b: (0, 0)),          # Ua^T
        pl.BlockSpec((1, Dd), lambda b: (0, 0)),           # Va row
    ]

    # Explicit scoped-VMEM limit: cover the estimated per-step working set,
    # clamped to 48 MiB (safe on v5e/v6e 128 MiB and v7x 64 MiB per core).
    enc_block = BB * S_pad * De * enc_bytes
    vmem_est = (2 * enc_block
                + 2 * BB * S_pad * Dd * 4
                + 2 * BB * (De + S_pad + Dd) * 4
                + 2 * (De * Dd + Dd * Dd) * enc_bytes + Dd * 4
                + (4 << 20))
    vmem_limit = int(min(48 << 20, max(32 << 20, vmem_est)))

    # NOTE: if a profile shows exposed encoder-block DMA after the tile-size
    # choice above, bump the encoder in_spec to pipeline_mode=pl.Buffered(3)
    # (only where VMEM headroom exists).
    ctx2d, attn2d = pl.pallas_call(
        _make_kernel(has_bias),
        out_shape=(
            jax.ShapeDtypeStruct((B_pad, De), out_dtype),
            jax.ShapeDtypeStruct((B_pad, S_pad), jnp.float32),
        ),
        grid=grid,
        in_specs=in_specs,
        out_specs=(
            pl.BlockSpec((BB, De), lambda b: (b, 0)),       # context (dense 2-D)
            pl.BlockSpec((BB, S_pad), lambda b: (b, 0)),    # attention (dense 2-D)
        ),
        compiler_params=pltpu.CompilerParams(
            dimension_semantics=("parallel",),
            vmem_limit_bytes=vmem_limit),
    )(*args)

    ctx = ctx2d[:B].reshape(B, 1, De)
    attn = attn2d[:B, :S].reshape(B, 1, S)
    return ctx, attn


def _reference(decoder_hidden, encoder_outputs, wa, ua, va, encoder_mask):
    # pure-JAX mirror of the PyTorch forward, for verification
    with jax.default_matmul_precision("highest"):
        pe = encoder_outputs @ wa.T                              # (B, S, Dd)
        pd = decoder_hidden @ ua.T                               # (B, Dd)
        score = jnp.tanh(pe + pd[:, None, :]) @ va.T             # (B, S, 1)
        if encoder_mask is not None:
            score = jnp.where(encoder_mask[:, :, None] != 0, score, -1e9)
        aw = jax.nn.softmax(score, axis=1).transpose(0, 2, 1)    # (B, 1, S)
        cv = jnp.einsum("bos,bsd->bod", aw, encoder_outputs)     # (B, 1, De)
    return cv, aw


if __name__ == "__main__":
    key = jax.random.PRNGKey(0)
    B, S, Dd, De = 2, 8, 32, 32
    k1, k2, k3, k4, k5 = jax.random.split(key, 5)

    decoder_hidden = jax.random.normal(k1, (B, Dd), dtype=jnp.float32)
    encoder_outputs = jax.random.normal(k2, (B, S, De), dtype=jnp.float32)

    # deterministic synthetic parameters (torch Linear weight shape = (out, in))
    wa = 0.1 * jax.random.normal(k3, (Dd, De), dtype=jnp.float32)
    ua = 0.1 * jax.random.normal(k4, (Dd, Dd), dtype=jnp.float32)
    va = 0.1 * jax.random.normal(k5, (1, Dd), dtype=jnp.float32)

    # mask: second batch element has 2 padded positions
    encoder_mask = jnp.array([[1] * S, [1] * (S - 2) + [0] * 2], dtype=jnp.int32)

    ref_ctx, ref_attn = _reference(decoder_hidden, encoder_outputs,
                                   wa, ua, va, encoder_mask)

    # f32 parity mode (tight tolerance)
    ctx32, attn32 = bahdanau_attention(decoder_hidden, encoder_outputs,
                                       wa, ua, va, encoder_mask,
                                       compute_dtype=jnp.float32)
    # bf16 fast path (default; kernel is HBM-bandwidth-bound)
    ctx16, attn16 = bahdanau_attention(decoder_hidden, encoder_outputs,
                                       wa, ua, va, encoder_mask)
    # no-mask path (skips the bias input and the add entirely)
    ctx_nm, attn_nm = bahdanau_attention(decoder_hidden, encoder_outputs,
                                         wa, ua, va)
    jax.block_until_ready((ctx32, attn32, ctx16, attn16, ctx_nm, attn_nm))

    assert ctx32.shape == (B, 1, De) and attn32.shape == (B, 1, S)
    assert jnp.allclose(ctx32, ref_ctx, atol=2e-3, rtol=2e-3)
    assert jnp.allclose(attn32, ref_attn, atol=2e-3, rtol=2e-3)

    assert jnp.allclose(ctx16, ref_ctx, atol=3e-2, rtol=3e-2)
    assert jnp.allclose(attn16, ref_attn, atol=3e-2, rtol=3e-2)

    ref_ctx_nm, ref_attn_nm = _reference(decoder_hidden, encoder_outputs,
                                         wa, ua, va, None)
    assert jnp.allclose(ctx_nm, ref_ctx_nm, atol=3e-2, rtol=3e-2)
    assert jnp.allclose(attn_nm, ref_attn_nm, atol=3e-2, rtol=3e-2)

    print("KERNEL_OK")
</pallas_src>

<mosaic_0001>
module attributes {stable_mosaic.version = 11 : i64} {
  func.func @kernel(%arg0: i32, %arg1: memref<8x32xf32, #tpu.memory_space<vmem>>, %arg2: memref<8x8x32xf32, #tpu.memory_space<vmem>>, %arg3: memref<8x8xf32, #tpu.memory_space<vmem>>, %arg4: memref<32x32xf32, #tpu.memory_space<vmem>>, %arg5: memref<32x32xf32, #tpu.memory_space<vmem>>, %arg6: memref<1x32xf32, #tpu.memory_space<vmem>>, %arg7: memref<8x32xf32, #tpu.memory_space<vmem>>, %arg8: memref<8x8xf32, #tpu.memory_space<vmem>>) attributes {dimension_semantics = [#tpu.dimension_semantics<parallel>], iteration_bounds = array<i64: 1>, scalar_prefetch = 0 : i64, scratch_operands = 0 : i64, tpu.core_type = #tpu.core_type<tc>, window_params = [{transform_indices = @transform_0, window_bounds = array<i64: 8, 32>}, {transform_indices = @transform_1, window_bounds = array<i64: 8, 8, 32>}, {transform_indices = @transform_2, window_bounds = array<i64: 8, 8>}, {pipeline_mode = #tpu.pipeline_mode<synchronous>, transform_indices = @transform_3, window_bounds = array<i64: 32, 32>}, {pipeline_mode = #tpu.pipeline_mode<synchronous>, transform_indices = @transform_4, window_bounds = array<i64: 32, 32>}, {pipeline_mode = #tpu.pipeline_mode<synchronous>, transform_indices = @transform_5, window_bounds = array<i64: 1, 32>}, {transform_indices = @transform_6, window_bounds = array<i64: 8, 32>}, {transform_indices = @transform_7, window_bounds = array<i64: 8, 8>}]} {
    %c0 = arith.constant 0 : index
    %c0_0 = arith.constant 0 : index
    %c0_1 = arith.constant 0 : index
    %0 = vector.load %arg2[%c0, %c0_0, %c0_1] : memref<8x8x32xf32, #tpu.memory_space<vmem>>, vector<8x8x32xf32>
    %1 = vector.shape_cast %0 : vector<8x8x32xf32> to vector<64x32xf32>
    %c0_2 = arith.constant 0 : index
    %c0_3 = arith.constant 0 : index
    %2 = vector.load %arg4[%c0_2, %c0_3] : memref<32x32xf32, #tpu.memory_space<vmem>>, vector<32x32xf32>
    %cst = arith.constant dense<0.000000e+00> : vector<64x32xf32>
    %3 = tpu.matmul %1, %2, %cst {dimension_numbers = #tpu.dot_dimension_numbers<[1], [0], [0], [1], [0, 0, 1, 1], [], []>} : vector<64x32xf32>, vector<32x32xf32>, vector<64x32xf32> -> vector<64x32xf32>
    %4 = vector.shape_cast %3 : vector<64x32xf32> to vector<8x8x32xf32>
    %c0_4 = arith.constant 0 : index
    %c0_5 = arith.constant 0 : index
    %5 = vector.load %arg1[%c0_4, %c0_5] : memref<8x32xf32, #tpu.memory_space<vmem>>, vector<8x32xf32>
    %c0_6 = arith.constant 0 : index
    %c0_7 = arith.constant 0 : index
    %6 = vector.load %arg5[%c0_6, %c0_7] : memref<32x32xf32, #tpu.memory_space<vmem>>, vector<32x32xf32>
    %cst_8 = arith.constant dense<0.000000e+00> : vector<8x32xf32>
    %7 = tpu.matmul %5, %6, %cst_8 {dimension_numbers = #tpu.dot_dimension_numbers<[1], [0], [0], [1], [0, 0, 1, 1], [], []>} : vector<8x32xf32>, vector<32x32xf32>, vector<8x32xf32> -> vector<8x32xf32>
    %8 = vector.shape_cast %7 : vector<8x32xf32> to vector<8x1x32xf32>
    %9 = vector.broadcast %8 : vector<8x1x32xf32> to vector<8x8x32xf32>
    %10 = arith.addf %4, %9 : vector<8x8x32xf32>
    %11 = math.tanh %10 : vector<8x8x32xf32>
    %c0_9 = arith.constant 0 : index
    %c0_10 = arith.constant 0 : index
    %12 = vector.load %arg6[%c0_9, %c0_10] : memref<1x32xf32, #tpu.memory_space<vmem>>, vector<1x32xf32>
    %13 = vector.shape_cast %12 : vector<1x32xf32> to vector<1x1x32xf32>
    %14 = vector.broadcast %13 : vector<1x1x32xf32> to vector<8x8x32xf32>
    %15 = arith.mulf %11, %14 : vector<8x8x32xf32>
    %cst_11 = arith.constant dense<0.000000e+00> : vector<8x8xf32>
    %16 = vector.multi_reduction <add>, %15, %cst_11 [2] : vector<8x8x32xf32> to vector<8x8xf32>
    %c0_12 = arith.constant 0 : index
    %c0_13 = arith.constant 0 : index
    %17 = vector.load %arg3[%c0_12, %c0_13] : memref<8x8xf32, #tpu.memory_space<vmem>>, vector<8x8xf32>
    %18 = arith.addf %16, %17 : vector<8x8xf32>
    %cst_14 = arith.constant dense<0xFF800000> : vector<8xf32>
    %19 = vector.multi_reduction <maximumf>, %18, %cst_14 [1] : vector<8x8xf32> to vector<8xf32>
    %20 = vector.shape_cast %19 : vector<8xf32> to vector<8x1xf32>
    %21 = vector.broadcast %20 : vector<8x1xf32> to vector<8x8xf32>
    %22 = arith.subf %18, %21 : vector<8x8xf32>
    %23 = math.exp %22 : vector<8x8xf32>
    %cst_15 = arith.constant dense<0.000000e+00> : vector<8xf32>
    %24 = vector.multi_reduction <add>, %23, %cst_15 [1] : vector<8x8xf32> to vector<8xf32>
    %25 = vector.shape_cast %24 : vector<8xf32> to vector<8x1xf32>
    %26 = tpu.reciprocal %25 {approx = true} : vector<8x1xf32> -> vector<8x1xf32>
    %27 = vector.shape_cast %23 : vector<8x8xf32> to vector<8x8x1xf32>
    %28 = vector.broadcast %27 : vector<8x8x1xf32> to vector<8x8x32xf32>
    %29 = arith.mulf %28, %0 : vector<8x8x32xf32>
    %cst_16 = arith.constant dense<0.000000e+00> : vector<8x32xf32>
    %30 = vector.multi_reduction <add>, %29, %cst_16 [1] : vector<8x8x32xf32> to vector<8x32xf32>
    %31 = vector.broadcast %26 : vector<8x1xf32> to vector<8x32xf32>
    %32 = arith.mulf %30, %31 : vector<8x32xf32>
    %c0_17 = arith.constant 0 : index
    %c0_18 = arith.constant 0 : index
    %33 = vector.load %arg7[%c0_17, %c0_18] : memref<8x32xf32, #tpu.memory_space<vmem>>, vector<8x32xf32>
    tpu.vector_store %arg7[%c0_17, %c0_18], %32 {strides = array<i32>} : memref<8x32xf32, #tpu.memory_space<vmem>>, vector<8x32xf32>,
    %34 = vector.broadcast %26 : vector<8x1xf32> to vector<8x8xf32>
    %35 = arith.mulf %23, %34 : vector<8x8xf32>
    %c0_19 = arith.constant 0 : index
    %c0_20 = arith.constant 0 : index
    %36 = vector.load %arg8[%c0_19, %c0_20] : memref<8x8xf32, #tpu.memory_space<vmem>>, vector<8x8xf32>
    tpu.vector_store %arg8[%c0_19, %c0_20], %35 {strides = array<i32>} : memref<8x8xf32, #tpu.memory_space<vmem>>, vector<8x8xf32>,
    return
  }
  func.func @transform_0(%arg0: i32) -> (i32, i32) {
    %c0_i32 = arith.constant 0 : i32
    %c0_i32_0 = arith.constant 0 : i32
    return %arg0, %c0_i32 : i32, i32
  }
  func.func @transform_1(%arg0: i32) -> (i32, i32, i32) {
    %c0_i32 = arith.constant 0 : i32
    %c0_i32_0 = arith.constant 0 : i32
    %c0_i32_1 = arith.constant 0 : i32
    return %arg0, %c0_i32, %c0_i32_0 : i32, i32, i32
  }
  func.func @transform_2(%arg0: i32) -> (i32, i32) {
    %c0_i32 = arith.constant 0 : i32
    %c0_i32_0 = arith.constant 0 : i32
    return %arg0, %c0_i32 : i32, i32
  }
  func.func @transform_3(%arg0: i32) -> (i32, i32) {
    %c0_i32 = arith.constant 0 : i32
    %c0_i32_0 = arith.constant 0 : i32
    %c0_i32_1 = arith.constant 0 : i32
    return %c0_i32, %c0_i32_0 : i32, i32
  }
  func.func @transform_4(%arg0: i32) -> (i32, i32) {
    %c0_i32 = arith.constant 0 : i32
    %c0_i32_0 = arith.constant 0 : i32
    %c0_i32_1 = arith.constant 0 : i32
    return %c0_i32, %c0_i32_0 : i32, i32
  }
  func.func @transform_5(%arg0: i32) -> (i32, i32) {
    %c0_i32 = arith.constant 0 : i32
    %c0_i32_0 = arith.constant 0 : i32
    %c0_i32_1 = arith.constant 0 : i32
    return %c0_i32, %c0_i32_0 : i32, i32
  }
  func.func @transform_6(%arg0: i32) -> (i32, i32) {
    %c0_i32 = arith.constant 0 : i32
    %c0_i32_0 = arith.constant 0 : i32
    return %arg0, %c0_i32 : i32, i32
  }
  func.func @transform_7(%arg0: i32) -> (i32, i32) {
    %c0_i32 = arith.constant 0 : i32
    %c0_i32_0 = arith.constant 0 : i32
    return %arg0, %c0_i32 : i32, i32
  }
}

</mosaic_0001>

<llo_original>
// kernel: tpu_custom_call.1
$region0: #{tpu_custom_call.1}
  #allocation0 [shape = 'u32[]', space=smem, size = 0x4, offset = 0x4, fixed_abs, tag = 'smem constant byte address 0x4 - core index']
  #allocation1 [shape = 'u32[144,128]{1,0:T(1,128)}', space=vmem, size = 0x12000, scoped, tag = 'internal scratch']
  %s0 = inlined_call_operand.hbm [shape: f32[8,32], index: 0, kind: input, shape index: {}]
  %s1 = inlined_call_operand.hbm [shape: f32[8,8,32], index: 1, kind: input, shape index: {}]
  %s2 = inlined_call_operand.hbm [shape: f32[8,8], index: 2, kind: input, shape index: {}]
  %s3 = inlined_call_operand.hbm [shape: f32[32,32], index: 3, kind: input, shape index: {}]
  %s4 = inlined_call_operand.hbm [shape: f32[32,32], index: 4, kind: input, shape index: {}]
  %s5 = inlined_call_operand.vmem [shape: f32[1,32], index: 5, kind: input, shape index: {}]
  %s6 = inlined_call_operand.hbm [shape: f32[8,32], index: 6, kind: output, shape index: {0}]
  %s7 = inlined_call_operand.hbm [shape: f32[8,8], index: 7, kind: output, shape index: {1}]
  %8 = xla_tuple %s6, %s7
  %s9 = sld [smem:[#allocation0]]
  $region62: #{tpu_custom_call.1} parent=0
    _
  %s11 = ssub.s32 1, %s9
  %s12 = scalar_select 0, %s11, %s9
  $region1: #{tpu_custom_call.1} parent=0
    #allocation2 [shape = 'u8[4096]{0}', space=vmem, size = 0x1000, scoped, tag = 'input window, operand 0, single buffered']
    #allocation3 [shape = 's32[1]{0}', space=sflag, size = 0x4, scoped, tag = 'scoped memory for tpu_custom_call.1']
    #allocation4 [shape = 's32[1]{0}', space=sflag, size = 0x4, scoped, tag = 'scoped memory for tpu_custom_call.1']
    #allocation5 [shape = 'u8[32768]{0}', space=vmem, size = 0x8000, scoped, tag = 'input window, operand 1, single buffered']
    #allocation6 [shape = 's32[1]{0}', space=sflag, size = 0x4, scoped, tag = 'scoped memory for tpu_custom_call.1']
    #allocation7 [shape = 'u8[4096]{0}', space=vmem, size = 0x1000, scoped, tag = 'input window, operand 2, single buffered']
    #allocation8 [shape = 'u8[16384]{0}', space=vmem, size = 0x4000, scoped, tag = 'input window, operand 3, single buffered']
    #allocation9 [shape = 's32[1]{0}', space=sflag, size = 0x4, scoped, tag = 'scoped memory for tpu_custom_call.1']
    #allocation10 [shape = 'u8[16384]{0}', space=vmem, size = 0x4000, scoped, tag = 'input window, operand 4, single buffered']
    #allocation11 [shape = 'u8[4096]{0}', space=vmem, size = 0x1000, scoped, tag = 'output window, operand 0, single buffered']
    #allocation12 [shape = 'u8[4096]{0}', space=vmem, size = 0x1000, scoped, tag = 'output window, operand 1, single buffered']
    #allocation13 [shape = 's32[1]{0}', space=sflag, size = 0x4, scoped, tag = 'scoped memory for tpu_custom_call.1']
    %13 = vsyncpa [#allocation3], 0
    %14 = vsyncpa [#allocation6], 0
    %15 = vsyncpa [#allocation9], 0
    %16 = vsyncpa [#allocation4], 0
    %17 = vsyncpa [#allocation13], 0
    // Predicated region
    $region2: #{tpu_custom_call.1} parent=1 // pred_check
      _
    $region3: #{tpu_custom_call.1} parent=1 // pred_check_branch
      %19 = sbr.rel (0) target = $region5
    $region4: #{tpu_custom_call.1} parent=1 // pred_region
      %s21 = ssub.s32 128, 128
      %22 = vsyncadd [#allocation3], %s21
      %s24 = sshll.u32 [#allocation2], 4
      %s25 = int_to_ptr.vmem [resolvable:$true] %s24
      %27 = dma.hbm_to_vmem [thread:$0]  %s0, 128, %s25, [#allocation3]
    $region5: #{tpu_custom_call.1} parent=1 // pred_fallthru
      _
    // Predicated region
    $region6: #{tpu_custom_call.1} parent=1 // pred_check
      _
    $region7: #{tpu_custom_call.1} parent=1 // pred_check_branch
      %29 = sbr.rel (0) target = $region9
    $region8: #{tpu_custom_call.1} parent=1 // pred_region
      %s31 = ssub.s32 1024, 1024
      %32 = vsyncadd [#allocation6], %s31
      %s33 = sshll.u32 [#allocation5], 4
      %s34 = int_to_ptr.vmem [resolvable:$true] %s33
      %39 = dma.hbm_to_vmem [thread:$0]  %s1, 1024, %s34, [#allocation6], 128, 128, 8
    $region9: #{tpu_custom_call.1} parent=1 // pred_fallthru
      _
    // Predicated region
    $region10: #{tpu_custom_call.1} parent=1 // pred_check
      _
    $region11: #{tpu_custom_call.1} parent=1 // pred_check_branch
      %41 = sbr.rel (0) target = $region13
    $region12: #{tpu_custom_call.1} parent=1 // pred_region
      %s43 = ssub.s32 128, 128
      %44 = vsyncadd [#allocation6], %s43
      %s46 = sshll.u32 [#allocation7], 4
      %s47 = int_to_ptr.vmem [resolvable:$true] %s46
      %49 = dma.hbm_to_vmem [thread:$0]  %s2, 128, %s47, [#allocation6]
    $region13: #{tpu_custom_call.1} parent=1 // pred_fallthru
      _
    // Predicated region
    $region14: #{tpu_custom_call.1} parent=1 // pred_check
      _
    $region15: #{tpu_custom_call.1} parent=1 // pred_check_branch
      %51 = sbr.rel (0) target = $region17
    $region16: #{tpu_custom_call.1} parent=1 // pred_region
      %s53 = ssub.s32 512, 512
      %54 = vsyncadd [#allocation9], %s53
      %s55 = sshll.u32 [#allocation8], 4
      %s56 = int_to_ptr.vmem [resolvable:$true] %s55
      %61 = dma.hbm_to_vmem [thread:$0]  %s3, 512, %s56, [#allocation9], 128, 128, 8
    $region17: #{tpu_custom_call.1} parent=1 // pred_fallthru
      _
    // Predicated region
    $region18: #{tpu_custom_call.1} parent=1 // pred_check
      _
    $region19: #{tpu_custom_call.1} parent=1 // pred_check_branch
      %63 = sbr.rel (0) target = $region21
    $region20: #{tpu_custom_call.1} parent=1 // pred_region
      %s65 = ssub.s32 512, 512
      %66 = vsyncadd [#allocation9], %s65
      %s67 = sshll.u32 [#allocation10], 4
      %s68 = int_to_ptr.vmem [resolvable:$true] %s67
      %73 = dma.hbm_to_vmem [thread:$0]  %s4, 512, %s68, [#allocation9], 128, 128, 8
    $region21: #{tpu_custom_call.1} parent=1 // pred_fallthru
      _
    // Predicated region
    $region22: #{tpu_custom_call.1} parent=1 // pred_check
      _
    $region23: #{tpu_custom_call.1} parent=1 // pred_check_branch
      %75 = sbr.rel (0) target = $region25
    $region24: #{tpu_custom_call.1} parent=1 // pred_region
      _
    $region25: #{tpu_custom_call.1} parent=1 // pred_fallthru
      _
    // Predicated region
    $region26: #{tpu_custom_call.1} parent=1 // pred_check
      _
    $region27: #{tpu_custom_call.1} parent=1 // pred_check_branch
      %77 = sbr.rel (0) target = $region29
    $region28: #{tpu_custom_call.1} parent=1 // pred_region
      %78 = dma.done [#allocation3], 128
    $region29: #{tpu_custom_call.1} parent=1 // pred_fallthru
      _
    // Predicated region
    $region30: #{tpu_custom_call.1} parent=1 // pred_check
      _
    $region31: #{tpu_custom_call.1} parent=1 // pred_check_branch
      %80 = sbr.rel (0) target = $region33
    $region32: #{tpu_custom_call.1} parent=1 // pred_region
      %81 = dma.done [#allocation6], 1024
    $region33: #{tpu_custom_call.1} parent=1 // pred_fallthru
      _
    // Predicated region
    $region34: #{tpu_custom_call.1} parent=1 // pred_check
      _
    $region35: #{tpu_custom_call.1} parent=1 // pred_check_branch
      %83 = sbr.rel (0) target = $region37
    $region36: #{tpu_custom_call.1} parent=1 // pred_region
      %84 = dma.done [#allocation6], 128
    $region37: #{tpu_custom_call.1} parent=1 // pred_fallthru
      _
    // Predicated region
    $region38: #{tpu_custom_call.1} parent=1 // pred_check
      _
    $region39: #{tpu_custom_call.1} parent=1 // pred_check_branch
      %86 = sbr.rel (0) target = $region41
    $region40: #{tpu_custom_call.1} parent=1 // pred_region
      %87 = dma.done [#allocation9], 512
    $region41: #{tpu_custom_call.1} parent=1 // pred_fallthru
      _
    // Predicated region
    $region42: #{tpu_custom_call.1} parent=1 // pred_check
      _
    $region43: #{tpu_custom_call.1} parent=1 // pred_check_branch
      %89 = sbr.rel (0) target = $region45
    $region44: #{tpu_custom_call.1} parent=1 // pred_region
      %90 = dma.done [#allocation9], 512
    $region45: #{tpu_custom_call.1} parent=1 // pred_fallthru
      _
    %v91 = vld [vmem:[#allocation5] sm:$0xff]
    %v92 = vld [vmem:[#allocation5 + $0x8] sm:$0xff]
    %v93 = vld [vmem:[#allocation5 + $0x10] sm:$0xff]
    %v94 = vld [vmem:[#allocation5 + $0x18] sm:$0xff]
    %v95 = vld [vmem:[#allocation5 + $0x20] sm:$0xff]
    %v96 = vld [vmem:[#allocation5 + $0x28] sm:$0xff]
    %v97 = vld [vmem:[#allocation5 + $0x30] sm:$0xff]
    %v98 = vld [vmem:[#allocation5 + $0x38] sm:$0xff]
    %v99 = vld [vmem:[#allocation8] sm:$0xff]
    %v100 = vld [vmem:[#allocation8 + $0x8] sm:$0xff]
    %v101 = vld [vmem:[#allocation8 + $0x10] sm:$0xff]
    %v102 = vld [vmem:[#allocation8 + $0x18] sm:$0xff]
    %vm103 = vcmask 261120
    %v105 = vsel %vm103, %v91, 0
    %v108 = vsel %vm103, %v92, 0
    %v111 = vsel %vm103, %v93, 0
    %v114 = vsel %vm103, %v94, 0
    %v117 = vsel %vm103, %v95, 0
    %v120 = vsel %vm103, %v96, 0
    %v123 = vsel %vm103, %v97, 0
    %v126 = vsel %vm103, %v98, 0
    %128 = vmatprep.subr.mxu0 0.0
    %129 = vmatpush1.msra.mxu0 %v99
    %130 = vmatprep.subr.mxu0 0.0
    %131 = vmatpush1.msra.mxu0 %v100
    %132 = vmatprep.subr.mxu0 0.0
    %133 = vmatpush1.msra.mxu0 %v101
    %134 = vmatprep.subr.mxu0 0.0
    %135 = vmatpush1.msra.mxu0 %v102
    %136 = vmatprep.subr.mxu0 0.0
    %137 = vmatpush1.msra.mxu0 0.0
    %138 = vmatprep.subr.mxu0 0.0
    %139 = vmatpush1.msra.mxu0 0.0
    %140 = vmatprep.subr.mxu0 0.0
    %141 = vmatpush1.msra.mxu0 0.0
    %142 = vmatprep.subr.mxu0 0.0
    %143 = vmatpush1.msra.mxu0 0.0
    %144 = vmatprep.subr.mxu0 0.0
    %145 = vmatpush1.msra.mxu0 0.0
    %146 = vmatprep.subr.mxu0 0.0
    %147 = vmatpush1.msra.mxu0 0.0
    %148 = vmatprep.subr.mxu0 0.0
    %149 = vmatpush1.msra.mxu0 0.0
    %150 = vmatprep.subr.mxu0 0.0
    %151 = vmatpush1.msra.mxu0 0.0
    %152 = vmatprep.subr.mxu0 0.0
    %153 = vmatpush1.msra.mxu0 0.0
    %154 = vmatprep.subr.mxu0 0.0
    %155 = vmatpush1.msra.mxu0 0.0
    %156 = vmatprep.subr.mxu0 0.0
    %157 = vmatpush1.msra.mxu0 0.0
    %158 = vmatprep.subr.mxu0 0.0
    %159 = vmatpush1.msra.mxu0 0.0
    %160 = vmatprep.subr.mxu0 0.0
    %161 = vmatpush1.msra.mxu0 0.0
    %162 = vmatprep.subr.mxu0 0.0
    %163 = vmatpush1.msra.mxu0 0.0
    %164 = vmatprep.subr.mxu0 0.0
    %165 = vmatpush1.msra.mxu0 0.0
    %166 = vmatprep.subr.mxu0 0.0
    %167 = vmatpush1.msra.mxu0 0.0
    %168 = vmatprep.subr.mxu0 0.0
    %169 = vmatpush1.msra.mxu0 0.0
    %170 = vmatprep.subr.mxu0 0.0
    %171 = vmatpush1.msra.mxu0 0.0
    %172 = vmatprep.subr.mxu0 0.0
    %173 = vmatpush1.msra.mxu0 0.0
    %174 = vmatprep.subr.mxu0 0.0
    %175 = vmatpush1.msra.mxu0 0.0
    %176 = vmatprep.subr.mxu0 0.0
    %177 = vmatpush1.msra.mxu0 0.0
    %178 = vmatprep.subr.mxu0 0.0
    %179 = vmatpush1.msra.mxu0 0.0
    %180 = vmatprep.subr.mxu0 0.0
    %181 = vmatpush1.msra.mxu0 0.0
    %182 = vmatprep.subr.mxu0 0.0
    %183 = vmatpush1.msra.mxu0 0.0
    %184 = vmatprep.subr.mxu0 0.0
    %185 = vmatpush1.msra.mxu0 0.0
    %186 = vmatprep.subr.mxu0 0.0
    %187 = vmatpush1.msra.mxu0 0.0
    %188 = vmatprep.subr.mxu0 0.0
    %189 = vmatpush1.msra.mxu0 0.0
    %190 = vmatprep.subr.mxu0 0.0
    %191 = vmatpush1.msra.mxu0 0.0
    %192 = vmatprep.mubr.f32.mxu0 0.0
    %193 = vmatmul.mubr.f32.gmra.mrb[0].mxu0 %v105
    %v194 = vpop.f32.mrb[0].mxu0
    %v195 = vadd.f32 0.0, %v194
    %v196 = vpop.f32.mrb[0].mxu0
    %197 = vmatprep.mubr.f32.mxu0 0.0
    %198 = vmatmul.mubr.f32.gmra.mrb[0].mxu0 %v108
    %v199 = vpop.f32.mrb[0].mxu0
    %v200 = vadd.f32 0.0, %v199
    %v201 = vpop.f32.mrb[0].mxu0
    %202 = vmatprep.mubr.f32.mxu0 0.0
    %203 = vmatmul.mubr.f32.gmra.mrb[0].mxu0 %v111
    %v204 = vpop.f32.mrb[0].mxu0
    %v205 = vadd.f32 0.0, %v204
    %v206 = vpop.f32.mrb[0].mxu0
    %207 = vmatprep.mubr.f32.mxu0 0.0
    %208 = vmatmul.mubr.f32.gmra.mrb[0].mxu0 %v114
    %v209 = vpop.f32.mrb[0].mxu0
    %v210 = vadd.f32 0.0, %v209
    %v211 = vpop.f32.mrb[0].mxu0
    %212 = vmatprep.mubr.f32.mxu0 0.0
    %213 = vmatmul.mubr.f32.gmra.mrb[0].mxu0 %v117
    %v214 = vpop.f32.mrb[0].mxu0
    %v215 = vadd.f32 0.0, %v214
    %v216 = vpop.f32.mrb[0].mxu0
    %217 = vmatprep.mubr.f32.mxu0 0.0
    %218 = vmatmul.mubr.f32.gmra.mrb[0].mxu0 %v120
    %v219 = vpop.f32.mrb[0].mxu0
    %v220 = vadd.f32 0.0, %v219
    %v221 = vpop.f32.mrb[0].mxu0
    %222 = vmatprep.mubr.f32.mxu0 0.0
    %223 = vmatmul.mubr.f32.gmra.mrb[0].mxu0 %v123
    %v224 = vpop.f32.mrb[0].mxu0
    %v225 = vadd.f32 0.0, %v224
    %v226 = vpop.f32.mrb[0].mxu0
    %227 = vmatprep.mubr.f32.mxu0 0.0
    %228 = vmatmul.mubr.f32.gmra.mrb[0].mxu0 %v126
    %v229 = vpop.f32.mrb[0].mxu0
    %v230 = vadd.f32 0.0, %v229
    %v231 = vpop.f32.mrb[0].mxu0
    %232 = vdwg.mxu0
    %v233 = vld [vmem:[#allocation2] sm:$0xff]
    %v234 = vld [vmem:[#allocation10] sm:$0xff]
    %v235 = vld [vmem:[#allocation10 + $0x8] sm:$0xff]
    %v236 = vld [vmem:[#allocation10 + $0x10] sm:$0xff]
    %v237 = vld [vmem:[#allocation10 + $0x18] sm:$0xff]
    %v239 = vsel %vm103, %v233, 0
    %241 = vmatprep.subr.mxu0 0.0
    %242 = vmatpush1.msra.mxu0 %v234
    %243 = vmatprep.subr.mxu0 0.0
    %244 = vmatpush1.msra.mxu0 %v235
    %245 = vmatprep.subr.mxu0 0.0
    %246 = vmatpush1.msra.mxu0 %v236
    %247 = vmatprep.subr.mxu0 0.0
    %248 = vmatpush1.msra.mxu0 %v237
    %249 = vmatprep.subr.mxu0 0.0
    %250 = vmatpush1.msra.mxu0 0.0
    %251 = vmatprep.subr.mxu0 0.0
    %252 = vmatpush1.msra.mxu0 0.0
    %253 = vmatprep.subr.mxu0 0.0
    %254 = vmatpush1.msra.mxu0 0.0
    %255 = vmatprep.subr.mxu0 0.0
    %256 = vmatpush1.msra.mxu0 0.0
    %257 = vmatprep.subr.mxu0 0.0
    %258 = vmatpush1.msra.mxu0 0.0
    %259 = vmatprep.subr.mxu0 0.0
    %260 = vmatpush1.msra.mxu0 0.0
    %261 = vmatprep.subr.mxu0 0.0
    %262 = vmatpush1.msra.mxu0 0.0
    %263 = vmatprep.subr.mxu0 0.0
    %264 = vmatpush1.msra.mxu0 0.0
    %265 = vmatprep.subr.mxu0 0.0
    %266 = vmatpush1.msra.mxu0 0.0
    %267 = vmatprep.subr.mxu0 0.0
    %268 = vmatpush1.msra.mxu0 0.0
    %269 = vmatprep.subr.mxu0 0.0
    %270 = vmatpush1.msra.mxu0 0.0
    %271 = vmatprep.subr.mxu0 0.0
    %272 = vmatpush1.msra.mxu0 0.0
    %273 = vmatprep.subr.mxu0 0.0
    %274 = vmatpush1.msra.mxu0 0.0
    %275 = vmatprep.subr.mxu0 0.0
    %276 = vmatpush1.msra.mxu0 0.0
    %277 = vmatprep.subr.mxu0 0.0
    %278 = vmatpush1.msra.mxu0 0.0
    %279 = vmatprep.subr.mxu0 0.0
    %280 = vmatpush1.msra.mxu0 0.0
    %281 = vmatprep.subr.mxu0 0.0
    %282 = vmatpush1.msra.mxu0 0.0
    %283 = vmatprep.subr.mxu0 0.0
    %284 = vmatpush1.msra.mxu0 0.0
    %285 = vmatprep.subr.mxu0 0.0
    %286 = vmatpush1.msra.mxu0 0.0
    %287 = vmatprep.subr.mxu0 0.0
    %288 = vmatpush1.msra.mxu0 0.0
    %289 = vmatprep.subr.mxu0 0.0
    %290 = vmatpush1.msra.mxu0 0.0
    %291 = vmatprep.subr.mxu0 0.0
    %292 = vmatpush1.msra.mxu0 0.0
    %293 = vmatprep.subr.mxu0 0.0
    %294 = vmatpush1.msra.mxu0 0.0
    %295 = vmatprep.subr.mxu0 0.0
    %296 = vmatpush1.msra.mxu0 0.0
    %297 = vmatprep.subr.mxu0 0.0
    %298 = vmatpush1.msra.mxu0 0.0
    %299 = vmatprep.subr.mxu0 0.0
    %300 = vmatpush1.msra.mxu0 0.0
    %301 = vmatprep.subr.mxu0 0.0
    %302 = vmatpush1.msra.mxu0 0.0
    %303 = vmatprep.subr.mxu0 0.0
    %304 = vmatpush1.msra.mxu0 0.0
    %305 = vmatprep.mubr.f32.mxu0 0.0
    %306 = vmatmul.mubr.f32.gmra.mrb[0].mxu0 %v239
    %v307 = vpop.f32.mrb[0].mxu0
    %v308 = vadd.f32 0.0, %v307
    %v309 = vpop.f32.mrb[0].mxu0
    %310 = vdwg.mxu0
    %v312 = vcombine.high %v308, %v308
    %v314 = vunpack.c.l.s4 1966171168
    %v315 = vunpack.c.0.s8 %v314
    %v316 = vlaneseq
    %v317 = vshrl.u32 %v316, 7
    %v318 = vsub.s32 %v315, %v317
    %v319 = vrot.slane %v308, %v318
    %v321 = vunpack.c.l.s4 1966171168
    %v322 = vunpack.c.0.s8 %v321
    %v323 = vlaneseq
    %v324 = vshrl.u32 %v323, 7
    %v325 = vsub.s32 %v322, %v324
    %v326 = vrot.slane %v312, %v325
    %v327 = vcombine.high %v319, %v319
    %v328 = vcombine.high %v326, %v326
    %v330 = vunpack.c.l.s4 1966171168
    %v331 = vunpack.c.0.s8 %v330
    %v332 = vlaneseq
    %v333 = vshrl.u32 %v332, 7
    %v334 = vsub.s32 %v331, %v333
    %v335 = vrot.slane %v319, %v334
    %v337 = vunpack.c.l.s4 1966171168
    %v338 = vunpack.c.0.s8 %v337
    %v339 = vlaneseq
    %v340 = vshrl.u32 %v339, 7
    %v341 = vsub.s32 %v338, %v340
    %v342 = vrot.slane %v326, %v341
    %v344 = vunpack.c.l.s4 1966171168
    %v345 = vunpack.c.0.s8 %v344
    %v346 = vlaneseq
    %v347 = vshrl.u32 %v346, 7
    %v348 = vsub.s32 %v345, %v347
    %v349 = vrot.slane %v327, %v348
    %v351 = vunpack.c.l.s4 1966171168
    %v352 = vunpack.c.0.s8 %v351
    %v353 = vlaneseq
    %v354 = vshrl.u32 %v353, 7
    %v355 = vsub.s32 %v352, %v354
    %v356 = vrot.slane %v328, %v355
    %v357 = vcombine.high %v335, %v335
    %v358 = vcombine.high %v342, %v342
    %v359 = vcombine.high %v349, %v349
    %v360 = vcombine.high %v356, %v356
    %v361 = vlaneseq
    %v362 = vshrl.u32 %v361, 7
    %v363 = vsub.s32 0, %v362
    %v364 = vrot.slane %v335, %v363
    %v365 = vlaneseq
    %v366 = vshrl.u32 %v365, 7
    %v367 = vsub.s32 0, %v366
    %v368 = vrot.slane %v349, %v367
    %v369 = vlaneseq
    %v370 = vshrl.u32 %v369, 7
    %v371 = vsub.s32 0, %v370
    %v372 = vrot.slane %v357, %v371
    %v373 = vlaneseq
    %v374 = vshrl.u32 %v373, 7
    %v375 = vsub.s32 0, %v374
    %v376 = vrot.slane %v359, %v375
    %v377 = vlaneseq
    %v378 = vshrl.u32 %v377, 7
    %v379 = vsub.s32 0, %v378
    %v380 = vrot.slane %v342, %v379
    %v381 = vlaneseq
    %v382 = vshrl.u32 %v381, 7
    %v383 = vsub.s32 0, %v382
    %v384 = vrot.slane %v356, %v383
    %v385 = vlaneseq
    %v386 = vshrl.u32 %v385, 7
    %v387 = vsub.s32 0, %v386
    %v388 = vrot.slane %v358, %v387
    %v389 = vlaneseq
    %v390 = vshrl.u32 %v389, 7
    %v391 = vsub.s32 0, %v390
    %v392 = vrot.slane %v360, %v391
    %v401 = vadd.f32 %v195, %v364
    %v402 = vadd.f32 %v200, %v368
    %v403 = vadd.f32 %v205, %v372
    %v404 = vadd.f32 %v210, %v376
    %v405 = vadd.f32 %v215, %v380
    %v406 = vadd.f32 %v220, %v384
    %v407 = vadd.f32 %v225, %v388
    %v408 = vadd.f32 %v230, %v392
    %v409 = vtanh.pop %v401
    %v410 = vtanh.pop %v402
    %v411 = vtanh.pop %v403
    %v412 = vtanh.pop %v404
    %v413 = vtanh.pop %v405
    %v414 = vtanh.pop %v406
    %v415 = vtanh.pop %v407
    %v416 = vtanh.pop %v408
    %v417 = vld [vmem:[%s5] sm:$0x1]
    %v419 = vlaneseq
    %v420 = vshrl.u32 %v419, 7
    %v421 = vsub.s32 0, %v420
    %v422 = vrot.slane %v417, %v421
    %v424 = vmul.f32 %v409, %v422
    %v425 = vmul.f32 %v410, %v422
    %v426 = vmul.f32 %v411, %v422
    %v427 = vmul.f32 %v412, %v422
    %v428 = vmul.f32 %v413, %v422
    %v429 = vmul.f32 %v414, %v422
    %v430 = vmul.f32 %v415, %v422
    %v431 = vmul.f32 %v416, %v422
    %v432 = vsel %vm103, %v424, 0.0
    %433 = vadd.xlane.f32.xlu0 %v432
    %v434 = vpop.xlane.xlu0 %433
    %v435 = vsel %vm103, %v425, 0.0
    %436 = vadd.xlane.f32.xlu0 %v435
    %v437 = vpop.xlane.xlu0 %436
    %v438 = vsel %vm103, %v426, 0.0
    %439 = vadd.xlane.f32.xlu0 %v438
    %v440 = vpop.xlane.xlu0 %439
    %v441 = vsel %vm103, %v427, 0.0
    %442 = vadd.xlane.f32.xlu0 %v441
    %v443 = vpop.xlane.xlu0 %442
    %v444 = vsel %vm103, %v428, 0.0
    %445 = vadd.xlane.f32.xlu0 %v444
    %v446 = vpop.xlane.xlu0 %445
    %v447 = vsel %vm103, %v429, 0.0
    %448 = vadd.xlane.f32.xlu0 %v447
    %v449 = vpop.xlane.xlu0 %448
    %v450 = vsel %vm103, %v430, 0.0
    %451 = vadd.xlane.f32.xlu0 %v450
    %v452 = vpop.xlane.xlu0 %451
    %v453 = vsel %vm103, %v431, 0.0
    %454 = vadd.xlane.f32.xlu0 %v453
    %v455 = vpop.xlane.xlu0 %454
    %v456 = vld [vmem:[#allocation7] sm:$0xff]
    %v458 = vlaneseq
    %v459 = vshrl.u32 %v458, 7
    %v460 = vsub.s32 0, %v459
    %v461 = vrot.slane %v456, %v460
    %463 = vbcast.lane.b32.xlu0 %v461, 256
    %v464 = vpop.permute.xlu0 %463
    %v465 = vlaneseq
    %v466 = vshrl.u32 %v465, 7
    %v467 = vsub.s32 1, %v466
    %v468 = vrot.slane %v456, %v467
    %470 = vbcast.lane.b32.xlu0 %v468, 256
    %v471 = vpop.permute.xlu0 %470
    %v472 = vlaneseq
    %v473 = vshrl.u32 %v472, 7
    %v474 = vsub.s32 2, %v473
    %v475 = vrot.slane %v456, %v474
    %477 = vbcast.lane.b32.xlu0 %v475, 256
    %v478 = vpop.permute.xlu0 %477
    %v479 = vlaneseq
    %v480 = vshrl.u32 %v479, 7
    %v481 = vsub.s32 3, %v480
    %v482 = vrot.slane %v456, %v481
    %484 = vbcast.lane.b32.xlu0 %v482, 256
    %v485 = vpop.permute.xlu0 %484
    %v486 = vlaneseq
    %v487 = vshrl.u32 %v486, 7
    %v488 = vsub.s32 4, %v487
    %v489 = vrot.slane %v456, %v488
    %491 = vbcast.lane.b32.xlu0 %v489, 256
    %v492 = vpop.permute.xlu0 %491
    %v493 = vlaneseq
    %v494 = vshrl.u32 %v493, 7
    %v495 = vsub.s32 5, %v494
    %v496 = vrot.slane %v456, %v495
    %498 = vbcast.lane.b32.xlu0 %v496, 256
    %v499 = vpop.permute.xlu0 %498
    %v500 = vlaneseq
    %v501 = vshrl.u32 %v500, 7
    %v502 = vsub.s32 6, %v501
    %v503 = vrot.slane %v456, %v502
    %505 = vbcast.lane.b32.xlu0 %v503, 256
    %v506 = vpop.permute.xlu0 %505
    %v507 = vlaneseq
    %v508 = vshrl.u32 %v507, 7
    %v509 = vsub.s32 7, %v508
    %v510 = vrot.slane %v456, %v509
    %512 = vbcast.lane.b32.xlu0 %v510, 256
    %v513 = vpop.permute.xlu0 %512
    %v522 = vadd.f32 %v434, %v464
    %v523 = vadd.f32 %v437, %v471
    %v524 = vadd.f32 %v440, %v478
    %v525 = vadd.f32 %v443, %v485
    %v526 = vadd.f32 %v446, %v492
    %v527 = vadd.f32 %v449, %v499
    %v528 = vadd.f32 %v452, %v506
    %v529 = vadd.f32 %v455, %v513
    %538 = vset.pattern.permute.xlu0 0
    %539 = vperm.xlu0 %538, %v522
    %v540 = vpop.permute.xlu0 %539
    %541 = vset.pattern.permute.xlu0 0
    %542 = vperm.xlu0 %541, %v523
    %v543 = vpop.permute.xlu0 %542
    %544 = vset.pattern.permute.xlu0 0
    %545 = vperm.xlu0 %544, %v524
    %v546 = vpop.permute.xlu0 %545
    %547 = vset.pattern.permute.xlu0 0
    %548 = vperm.xlu0 %547, %v525
    %v549 = vpop.permute.xlu0 %548
    %550 = vset.pattern.permute.xlu0 0
    %551 = vperm.xlu0 %550, %v526
    %v552 = vpop.permute.xlu0 %551
    %553 = vset.pattern.permute.xlu0 0
    %554 = vperm.xlu0 %553, %v527
    %v555 = vpop.permute.xlu0 %554
    %556 = vset.pattern.permute.xlu0 0
    %557 = vperm.xlu0 %556, %v528
    %v558 = vpop.permute.xlu0 %557
    %559 = vset.pattern.permute.xlu0 0
    %560 = vperm.xlu0 %559, %v529
    %v561 = vpop.permute.xlu0 %560
    %v562 = vlaneseq
    %v563 = vand.u32 %v562, 127
    %v564 = vlaneseq
    %v565 = vshrl.u32 %v564, 7
    %v566 = vsub.s32 %v563, %v565
    %v567 = vrot.slane %v540, %v566
    %v568 = vlaneseq
    %v569 = vshrl.u32 %v568, 7
    %v570 = vsub.s32 %v563, %v569
    %v571 = vrot.slane %v543, %v570
    %v572 = vlaneseq
    %v573 = vshrl.u32 %v572, 7
    %v574 = vsub.s32 %v563, %v573
    %v575 = vrot.slane %v546, %v574
    %v576 = vlaneseq
    %v577 = vshrl.u32 %v576, 7
    %v578 = vsub.s32 %v563, %v577
    %v579 = vrot.slane %v549, %v578
    %v580 = vlaneseq
    %v581 = vshrl.u32 %v580, 7
    %v582 = vsub.s32 %v563, %v581
    %v583 = vrot.slane %v552, %v582
    %v584 = vlaneseq
    %v585 = vshrl.u32 %v584, 7
    %v586 = vsub.s32 %v563, %v585
    %v587 = vrot.slane %v555, %v586
    %v588 = vlaneseq
    %v589 = vshrl.u32 %v588, 7
    %v590 = vsub.s32 %v563, %v589
    %v591 = vrot.slane %v558, %v590
    %v592 = vlaneseq
    %v593 = vshrl.u32 %v592, 7
    %v594 = vsub.s32 %v563, %v593
    %v595 = vrot.slane %v561, %v594
    %vm596 = vcmask 1041409
    %v597 = vsel %vm596, %v571, %v567
    %vm598 = vcmask 1042434
    %v599 = vsel %vm598, %v575, %v597
    %vm600 = vcmask 1043459
    %v601 = vsel %vm600, %v579, %v599
    %vm602 = vcmask 1044484
    %v603 = vsel %vm602, %v583, %v601
    %vm604 = vcmask 1045509
    %v605 = vsel %vm604, %v587, %v603
    %vm606 = vcmask 1046534
    %v607 = vsel %vm606, %v591, %v605
    %vm608 = vcmask 1047559
    %v609 = vsel %vm608, %v595, %v607
    %vm611 = vcmask 64512
    %v612 = vsel %vm611, %v609, -inf
    %613 = vmax.xlane.f32.xlu0 %v612
    %v614 = vpop.xlane.xlu0 %613
    %v616 = vlaneseq
    %v617 = vshrl.u32 %v616, 7
    %v618 = vsub.s32 0, %v617
    %v619 = vrot.slane %v614, %v618
    %v620 = vlaneseq
    %v621 = vshrl.u32 %v620, 7
    %v622 = vsub.s32 1, %v621
    %v623 = vrot.slane %v614, %v622
    %v624 = vlaneseq
    %v625 = vshrl.u32 %v624, 7
    %v626 = vsub.s32 2, %v625
    %v627 = vrot.slane %v614, %v626
    %v628 = vlaneseq
    %v629 = vshrl.u32 %v628, 7
    %v630 = vsub.s32 3, %v629
    %v631 = vrot.slane %v614, %v630
    %v632 = vlaneseq
    %v633 = vshrl.u32 %v632, 7
    %v634 = vsub.s32 4, %v633
    %v635 = vrot.slane %v614, %v634
    %v636 = vlaneseq
    %v637 = vshrl.u32 %v636, 7
    %v638 = vsub.s32 5, %v637
    %v639 = vrot.slane %v614, %v638
    %v640 = vlaneseq
    %v641 = vshrl.u32 %v640, 7
    %v642 = vsub.s32 6, %v641
    %v643 = vrot.slane %v614, %v642
    %v644 = vlaneseq
    %v645 = vshrl.u32 %v644, 7
    %v646 = vsub.s32 7, %v645
    %v647 = vrot.slane %v614, %v646
    %v656 = vsub.f32 %v522, %v619
    %v657 = vsub.f32 %v523, %v623
    %v658 = vsub.f32 %v524, %v627
    %v659 = vsub.f32 %v525, %v631
    %v660 = vsub.f32 %v526, %v635
    %v661 = vsub.f32 %v527, %v639
    %v662 = vsub.f32 %v528, %v643
    %v663 = vsub.f32 %v529, %v647
    %v664 = vmul.f32 %v656, 1.442695
    %v665 = vpow.pop %v664
    %v666 = vmul.f32 %v657, 1.442695
    %v667 = vpow.pop %v666
    %v668 = vmul.f32 %v658, 1.442695
    %v669 = vpow.pop %v668
    %v670 = vmul.f32 %v659, 1.442695
    %v671 = vpow.pop %v670
    %v672 = vmul.f32 %v660, 1.442695
    %v673 = vpow.pop %v672
    %v674 = vmul.f32 %v661, 1.442695
    %v675 = vpow.pop %v674
    %v676 = vmul.f32 %v662, 1.442695
    %v677 = vpow.pop %v676
    %v678 = vmul.f32 %v663, 1.442695
    %v679 = vpow.pop %v678
    %688 = vset.pattern.permute.xlu0 0
    %689 = vperm.xlu0 %688, %v665
    %v690 = vpop.permute.xlu0 %689
    %691 = vset.pattern.permute.xlu0 0
    %692 = vperm.xlu0 %691, %v667
    %v693 = vpop.permute.xlu0 %692
    %694 = vset.pattern.permute.xlu0 0
    %695 = vperm.xlu0 %694, %v669
    %v696 = vpop.permute.xlu0 %695
    %697 = vset.pattern.permute.xlu0 0
    %698 = vperm.xlu0 %697, %v671
    %v699 = vpop.permute.xlu0 %698
    %700 = vset.pattern.permute.xlu0 0
    %701 = vperm.xlu0 %700, %v673
    %v702 = vpop.permute.xlu0 %701
    %703 = vset.pattern.permute.xlu0 0
    %704 = vperm.xlu0 %703, %v675
    %v705 = vpop.permute.xlu0 %704
    %706 = vset.pattern.permute.xlu0 0
    %707 = vperm.xlu0 %706, %v677
    %v708 = vpop.permute.xlu0 %707
    %709 = vset.pattern.permute.xlu0 0
    %710 = vperm.xlu0 %709, %v679
    %v711 = vpop.permute.xlu0 %710
    %v712 = vlaneseq
    %v713 = vshrl.u32 %v712, 7
    %v714 = vsub.s32 %v563, %v713
    %v715 = vrot.slane %v690, %v714
    %v716 = vlaneseq
    %v717 = vshrl.u32 %v716, 7
    %v718 = vsub.s32 %v563, %v717
    %v719 = vrot.slane %v693, %v718
    %v720 = vlaneseq
    %v721 = vshrl.u32 %v720, 7
    %v722 = vsub.s32 %v563, %v721
    %v723 = vrot.slane %v696, %v722
    %v724 = vlaneseq
    %v725 = vshrl.u32 %v724, 7
    %v726 = vsub.s32 %v563, %v725
    %v727 = vrot.slane %v699, %v726
    %v728 = vlaneseq
    %v729 = vshrl.u32 %v728, 7
    %v730 = vsub.s32 %v563, %v729
    %v731 = vrot.slane %v702, %v730
    %v732 = vlaneseq
    %v733 = vshrl.u32 %v732, 7
    %v734 = vsub.s32 %v563, %v733
    %v735 = vrot.slane %v705, %v734
    %v736 = vlaneseq
    %v737 = vshrl.u32 %v736, 7
    %v738 = vsub.s32 %v563, %v737
    %v739 = vrot.slane %v708, %v738
    %v740 = vlaneseq
    %v741 = vshrl.u32 %v740, 7
    %v742 = vsub.s32 %v563, %v741
    %v743 = vrot.slane %v711, %v742
    %v744 = vsel %vm596, %v719, %v715
    %v745 = vsel %vm598, %v723, %v744
    %v746 = vsel %vm600, %v727, %v745
    %v747 = vsel %vm602, %v731, %v746
    %v748 = vsel %vm604, %v735, %v747
    %v749 = vsel %vm606, %v739, %v748
    %v750 = vsel %vm608, %v743, %v749
    %v752 = vsel %vm611, %v750, 0.0
    %753 = vadd.xlane.f32.xlu0 %v752
    %v754 = vpop.xlane.xlu0 %753
    %v755 = vrcp.pop %v754
    %v764 = vmul.f32 %v690, %v91
    %v765 = vmul.f32 %v693, %v92
    %v766 = vmul.f32 %v696, %v93
    %v767 = vmul.f32 %v699, %v94
    %v768 = vmul.f32 %v702, %v95
    %v769 = vmul.f32 %v705, %v96
    %v770 = vmul.f32 %v708, %v97
    %v771 = vmul.f32 %v711, %v98
    %v772 = vsel %vm103, %v764, 0.0
    %v773 = vrot.slane %v772, 4
    %v774 = vadd.f32 %v772, %v773
    %v775 = vrot.slane %v774, 2
    %v776 = vadd.f32 %v774, %v775
    %v777 = vrot.slane %v776, 1
    %v778 = vadd.f32 %v776, %v777
    %v779 = vsel %vm103, %v765, 0.0
    %v780 = vrot.slane %v779, 4
    %v781 = vadd.f32 %v779, %v780
    %v782 = vrot.slane %v781, 2
    %v783 = vadd.f32 %v781, %v782
    %v784 = vrot.slane %v783, 1
    %v785 = vadd.f32 %v783, %v784
    %v786 = vsel %vm103, %v766, 0.0
    %v787 = vrot.slane %v786, 4
    %v788 = vadd.f32 %v786, %v787
    %v789 = vrot.slane %v788, 2
    %v790 = vadd.f32 %v788, %v789
    %v791 = vrot.slane %v790, 1
    %v792 = vadd.f32 %v790, %v791
    %v793 = vsel %vm103, %v767, 0.0
    %v794 = vrot.slane %v793, 4
    %v795 = vadd.f32 %v793, %v794
    %v796 = vrot.slane %v795, 2
    %v797 = vadd.f32 %v795, %v796
    %v798 = vrot.slane %v797, 1
    %v799 = vadd.f32 %v797, %v798
    %v800 = vsel %vm103, %v768, 0.0
    %v801 = vrot.slane %v800, 4
    %v802 = vadd.f32 %v800, %v801
    %v803 = vrot.slane %v802, 2
    %v804 = vadd.f32 %v802, %v803
    %v805 = vrot.slane %v804, 1
    %v806 = vadd.f32 %v804, %v805
    %v807 = vsel %vm103, %v769, 0.0
    %v808 = vrot.slane %v807, 4
    %v809 = vadd.f32 %v807, %v808
    %v810 = vrot.slane %v809, 2
    %v811 = vadd.f32 %v809, %v810
    %v812 = vrot.slane %v811, 1
    %v813 = vadd.f32 %v811, %v812
    %v814 = vsel %vm103, %v770, 0.0
    %v815 = vrot.slane %v814, 4
    %v816 = vadd.f32 %v814, %v815
    %v817 = vrot.slane %v816, 2
    %v818 = vadd.f32 %v816, %v817
    %v819 = vrot.slane %v818, 1
    %v820 = vadd.f32 %v818, %v819
    %v821 = vsel %vm103, %v771, 0.0
    %v822 = vrot.slane %v821, 4
    %v823 = vadd.f32 %v821, %v822
    %v824 = vrot.slane %v823, 2
    %v825 = vadd.f32 %v823, %v824
    %v826 = vrot.slane %v825, 1
    %v827 = vadd.f32 %v825, %v826
    %v829 = vrot.slane %v755, 1
    %v830 = vrot.slane %v755, 2
    %v831 = vrot.slane %v755, 3
    %v832 = vrot.slane %v755, 4
    %v833 = vrot.slane %v755, 5
    %v834 = vrot.slane %v755, 6
    %v835 = vrot.slane %v755, 7
    %v844 = vmul.f32 %v778, %v755
    %v845 = vmul.f32 %v785, %v829
    %v846 = vmul.f32 %v792, %v830
    %v847 = vmul.f32 %v799, %v831
    %v848 = vmul.f32 %v806, %v832
    %v849 = vmul.f32 %v813, %v833
    %v850 = vmul.f32 %v820, %v834
    %v851 = vmul.f32 %v827, %v835
    %v860 = vrot.slane %v845, 7
    %v861 = vsel %vm596, %v860, %v844
    %v862 = vrot.slane %v846, 6
    %v863 = vsel %vm598, %v862, %v861
    %v864 = vrot.slane %v847, 5
    %v865 = vsel %vm600, %v864, %v863
    %v866 = vrot.slane %v848, 4
    %v867 = vsel %vm602, %v866, %v865
    %v868 = vrot.slane %v849, 3
    %v869 = vsel %vm604, %v868, %v867
    %v870 = vrot.slane %v850, 2
    %v871 = vsel %vm606, %v870, %v869
    %v872 = vrot.slane %v851, 1
    %v873 = vsel %vm608, %v872, %v871
    %875 = vst.msk [vmem:[#allocation11] sm:$0xff] %vm103, %v873
    %v876 = vlaneseq
    %v877 = vshrl.u32 %v876, 7
    %v878 = vsub.s32 0, %v877
    %v879 = vrot.slane %v755, %v878
    %v880 = vlaneseq
    %v881 = vshrl.u32 %v880, 7
    %v882 = vsub.s32 1, %v881
    %v883 = vrot.slane %v755, %v882
    %v884 = vlaneseq
    %v885 = vshrl.u32 %v884, 7
    %v886 = vsub.s32 2, %v885
    %v887 = vrot.slane %v755, %v886
    %v888 = vlaneseq
    %v889 = vshrl.u32 %v888, 7
    %v890 = vsub.s32 3, %v889
    %v891 = vrot.slane %v755, %v890
    %v892 = vlaneseq
    %v893 = vshrl.u32 %v892, 7
    %v894 = vsub.s32 4, %v893
    %v895 = vrot.slane %v755, %v894
    %v896 = vlaneseq
    %v897 = vshrl.u32 %v896, 7
    %v898 = vsub.s32 5, %v897
    %v899 = vrot.slane %v755, %v898
    %v900 = vlaneseq
    %v901 = vshrl.u32 %v900, 7
    %v902 = vsub.s32 6, %v901
    %v903 = vrot.slane %v755, %v902
    %v904 = vlaneseq
    %v905 = vshrl.u32 %v904, 7
    %v906 = vsub.s32 7, %v905
    %v907 = vrot.slane %v755, %v906
    %v916 = vmul.f32 %v665, %v879
    %v917 = vmul.f32 %v667, %v883
    %v918 = vmul.f32 %v669, %v887
    %v919 = vmul.f32 %v671, %v891
    %v920 = vmul.f32 %v673, %v895
    %v921 = vmul.f32 %v675, %v899
    %v922 = vmul.f32 %v677, %v903
    %v923 = vmul.f32 %v679, %v907
    %932 = vset.pattern.permute.xlu0 0
    %933 = vperm.xlu0 %932, %v916
    %v934 = vpop.permute.xlu0 %933
    %935 = vset.pattern.permute.xlu0 0
    %936 = vperm.xlu0 %935, %v917
    %v937 = vpop.permute.xlu0 %936
    %938 = vset.pattern.permute.xlu0 0
    %939 = vperm.xlu0 %938, %v918
    %v940 = vpop.permute.xlu0 %939
    %941 = vset.pattern.permute.xlu0 0
    %942 = vperm.xlu0 %941, %v919
    %v943 = vpop.permute.xlu0 %942
    %944 = vset.pattern.permute.xlu0 0
    %945 = vperm.xlu0 %944, %v920
    %v946 = vpop.permute.xlu0 %945
    %947 = vset.pattern.permute.xlu0 0
    %948 = vperm.xlu0 %947, %v921
    %v949 = vpop.permute.xlu0 %948
    %950 = vset.pattern.permute.xlu0 0
    %951 = vperm.xlu0 %950, %v922
    %v952 = vpop.permute.xlu0 %951
    %953 = vset.pattern.permute.xlu0 0
    %954 = vperm.xlu0 %953, %v923
    %v955 = vpop.permute.xlu0 %954
    %v956 = vlaneseq
    %v957 = vshrl.u32 %v956, 7
    %v958 = vsub.s32 %v563, %v957
    %v959 = vrot.slane %v934, %v958
    %v960 = vlaneseq
    %v961 = vshrl.u32 %v960, 7
    %v962 = vsub.s32 %v563, %v961
    %v963 = vrot.slane %v937, %v962
    %v964 = vlaneseq
    %v965 = vshrl.u32 %v964, 7
    %v966 = vsub.s32 %v563, %v965
    %v967 = vrot.slane %v940, %v966
    %v968 = vlaneseq
    %v969 = vshrl.u32 %v968, 7
    %v970 = vsub.s32 %v563, %v969
    %v971 = vrot.slane %v943, %v970
    %v972 = vlaneseq
    %v973 = vshrl.u32 %v972, 7
    %v974 = vsub.s32 %v563, %v973
    %v975 = vrot.slane %v946, %v974
    %v976 = vlaneseq
    %v977 = vshrl.u32 %v976, 7
    %v978 = vsub.s32 %v563, %v977
    %v979 = vrot.slane %v949, %v978
    %v980 = vlaneseq
    %v981 = vshrl.u32 %v980, 7
    %v982 = vsub.s32 %v563, %v981
    %v983 = vrot.slane %v952, %v982
    %v984 = vlaneseq
    %v985 = vshrl.u32 %v984, 7
    %v986 = vsub.s32 %v563, %v985
    %v987 = vrot.slane %v955, %v986
    %v988 = vsel %vm596, %v963, %v959
    %v989 = vsel %vm598, %v967, %v988
    %v990 = vsel %vm600, %v971, %v989
    %v991 = vsel %vm602, %v975, %v990
    %v992 = vsel %vm604, %v979, %v991
    %v993 = vsel %vm606, %v983, %v992
    %v994 = vsel %vm608, %v987, %v993
    %996 = vst.msk [vmem:[#allocation12] sm:$0xff] %vm611, %v994
    // Predicated region
    $region46: #{tpu_custom_call.1} parent=1 // pred_check
      _
    $region47: #{tpu_custom_call.1} parent=1 // pred_check_branch
      %998 = sbr.rel (0) target = $region49
    $region48: #{tpu_custom_call.1} parent=1 // pred_region
      %s1000 = ssub.s32 128, 128
      %1001 = vsyncadd [#allocation4], %s1000
      %s1003 = sshll.u32 [#allocation11], 4
      %s1004 = int_to_ptr.vmem [resolvable:$true] %s1003
      %1006 = dma.vmem_to_hbm [thread:$0]  %s1004, 128, %s6, [#allocation4]
    $region49: #{tpu_custom_call.1} parent=1 // pred_fallthru
      _
    // Predicated region
    $region50: #{tpu_custom_call.1} parent=1 // pred_check
      _
    $region51: #{tpu_custom_call.1} parent=1 // pred_check_branch
      %1008 = sbr.rel (0) target = $region53
    $region52: #{tpu_custom_call.1} parent=1 // pred_region
      %s1010 = ssub.s32 128, 128
      %1011 = vsyncadd [#allocation13], %s1010
      %s1013 = sshll.u32 [#allocation12], 4
      %s1014 = int_to_ptr.vmem [resolvable:$true] %s1013
      %1016 = dma.vmem_to_hbm [thread:$0]  %s1014, 128, %s7, [#allocation13]
    $region53: #{tpu_custom_call.1} parent=1 // pred_fallthru
      _
    // Predicated region
    $region54: #{tpu_custom_call.1} parent=1 // pred_check
      _
    $region55: #{tpu_custom_call.1} parent=1 // pred_check_branch
      %1018 = sbr.rel (0) target = $region57
    $region56: #{tpu_custom_call.1} parent=1 // pred_region
      %1019 = dma.done [#allocation4], 128
    $region57: #{tpu_custom_call.1} parent=1 // pred_fallthru
      _
    // Predicated region
    $region58: #{tpu_custom_call.1} parent=1 // pred_check
      _
    $region59: #{tpu_custom_call.1} parent=1 // pred_check_branch
      %1021 = sbr.rel (0) target = $region61
    $region60: #{tpu_custom_call.1} parent=1 // pred_region
      %1022 = dma.done [#allocation13], 128
    $region61: #{tpu_custom_call.1} parent=1 // pred_fallthru
      _
    %1023 = vsyncpa [#allocation3], 1
    %1024 = vsyncpa [#allocation6], 1
    %1025 = vsyncpa [#allocation9], 1
    %1026 = vsyncpa [#allocation4], 1
    %1027 = vsyncpa [#allocation13], 1

</llo_original>
